<compile_context>
chip_gen: v6e
topology: v6e:2x2x1
jax: 0.10.0
libtpu: 0.0.40
codegen_flags: <defaults>
</compile_context>

<pallas_src>
import math

import jax
import jax.numpy as jnp
from jax.experimental import pallas as pl
from jax.experimental.pallas import tpu as pltpu


def sym_exp(x):
    return jnp.sign(x) * (jnp.exp(jnp.abs(x)) - 1.0)


def _round_up(x: int, m: int) -> int:
    return ((x + m - 1) // m) * m


def _vmem_capacity_bytes() -> int:
    try:
        return int(pltpu.get_tpu_info().vmem_capacity_bytes)
    except Exception:
        return 64 << 20  # conservative (v7x per-TC)


# ----------------------------- kernels -----------------------------------------------------


def _reward_head_kernel(x_ref, w1_ref, b1_ref, w2_ref, b2_ref, o_ref):
    # x_ref:(TM,D)  w1_ref:(D,H) bf16  b1_ref:(1,H) f32  w2_ref:(H,Vp) bf16  b2_ref:(1,Vp) f32
    x = x_ref[...].astype(jnp.bfloat16)                        # no-op if x is already bf16
    h = jnp.dot(x, w1_ref[...], preferred_element_type=jnp.float32) + b1_ref[...]
    h = h * jax.nn.sigmoid(h)                                  # SiLU in f32 (VPU + EUP)
    logits = (
        jnp.dot(h.astype(jnp.bfloat16), w2_ref[...], preferred_element_type=jnp.float32)
        + b2_ref[...]
    )
    o_ref[...] = logits.astype(o_ref.dtype)


def _reward_head_kernel_ktiled(x_ref, w1_ref, b1_ref, w2_ref, b2_ref, o_ref, h_acc):
    # Large-D fallback: accumulate h = x @ w1 over K tiles, finalize at the last K step.
    k = pl.program_id(1)

    @pl.when(k == 0)
    def _():
        h_acc[...] = jnp.zeros_like(h_acc)

    h_acc[...] += jnp.dot(
        x_ref[...].astype(jnp.bfloat16), w1_ref[...], preferred_element_type=jnp.float32
    )

    @pl.when(k == pl.num_programs(1) - 1)
    def _():
        h = h_acc[...] + b1_ref[...]
        h = h * jax.nn.sigmoid(h)
        logits = (
            jnp.dot(h.astype(jnp.bfloat16), w2_ref[...], preferred_element_type=jnp.float32)
            + b2_ref[...]
        )
        o_ref[...] = logits.astype(o_ref.dtype)


# ----------------------------- params ------------------------------------------------------


def init_reward_head_params(key, embed_dim: int, num_values: int = 129):
    """Deterministic init mimicking torch.nn.Linear defaults (uniform +-1/sqrt(fan_in))."""
    hidden = embed_dim * 2
    k1, k2, k3, k4 = jax.random.split(key, 4)
    lim1 = 1.0 / math.sqrt(embed_dim)
    lim2 = 1.0 / math.sqrt(hidden)
    return {
        "w1": jax.random.uniform(k1, (embed_dim, hidden), jnp.float32, -lim1, lim1),
        "b1": jax.random.uniform(k2, (hidden,), jnp.float32, -lim1, lim1),
        "w2": jax.random.uniform(k3, (hidden, num_values), jnp.float32, -lim2, lim2),
        "b2": jax.random.uniform(k4, (num_values,), jnp.float32, -lim2, lim2),
        # buffer carried by the module (not used in the logits forward pass)
        "reward_head_values": sym_exp(jnp.linspace(-15.0, 15.0, num_values)) / 100.0,
    }


def prepare_reward_head_params(params):
    """One-time weight prep: bf16 cast + pad num_values to a lane-dense multiple of 128.

    Hoisted out of the per-call forward so no f32->bf16 weight rewrite happens per step.
    Padding columns of w2/b2 are zero, so padded logit bins are exactly 0.
    """
    w1 = jnp.asarray(params["w1"])
    b1 = jnp.asarray(params["b1"]).reshape(1, -1)
    w2 = jnp.asarray(params["w2"])
    b2 = jnp.asarray(params["b2"]).reshape(1, -1)
    V = w2.shape[1]
    Vp = _round_up(V, 128)
    if Vp != V:
        w2 = jnp.pad(w2, ((0, 0), (0, Vp - V)))
        b2 = jnp.pad(b2, ((0, 0), (0, Vp - V)))
    return {
        "w1": w1.astype(jnp.bfloat16),
        "b1": b1.astype(jnp.float32),
        "w2": w2.astype(jnp.bfloat16),
        "b2": b2.astype(jnp.float32),
        "num_values": int(V),
        "reward_head_values": params.get("reward_head_values"),
    }


# ----------------------------- forward -----------------------------------------------------


def reward_head_forward(x, prep, *, tm=None, out_dtype=jnp.float32, return_padded=False):
    """x: (..., embed_dim) float32/bfloat16 -> logits: (..., num_values) in `out_dtype`.

    `prep` is the output of prepare_reward_head_params. Feed x in bf16 upstream to halve
    the activation DMA bytes (the in-kernel cast then becomes a no-op).
    """
    w1, b1, w2, b2 = prep["w1"], prep["b1"], prep["w2"], prep["b2"]
    V = prep["num_values"]
    D, H = w1.shape
    Vp = w2.shape[1]

    lead = x.shape[:-1]
    x2d = x.reshape(-1, D)
    M = x2d.shape[0]
    x_bytes = x2d.dtype.itemsize
    out_bytes = jnp.dtype(out_dtype).itemsize

    vmem_cap = _vmem_capacity_bytes()
    vmem_soft_cap = int(0.85 * vmem_cap)
    is_v7x_like = vmem_cap <= (64 << 20)  # 64 MiB per-TC, 2 TensorCores share the grid

    if tm is None:
        tm = 256 if is_v7x_like else 512

    # --- row tiling: minimal padding, TM multiple of 16 (bf16 sublane packing),
    #     and >=2 row tiles on 2-TC parts so both cores get work ---
    n_row = max(1, pl.cdiv(M, tm))
    if is_v7x_like and M > 128 and n_row == 1:
        n_row = 2
    TM = _round_up(pl.cdiv(M, n_row), 16)
    Mp = n_row * TM
    if Mp != M:
        x2d = jnp.pad(x2d, ((0, Mp - M), (0, 0)))

    # --- VMEM budget (single-buffered resident weights + double-buffered x/out streams) ---
    w_resident = (
        w1.size * w1.dtype.itemsize + w2.size * w2.dtype.itemsize + b1.size * 4 + b2.size * 4
    )
    stream_bytes = 2 * TM * D * x_bytes + 2 * TM * Vp * out_bytes
    resident_budget = w_resident + stream_bytes + (4 << 20)

    cost = pl.CostEstimate(
        flops=2 * Mp * (D * H + H * Vp),
        transcendentals=Mp * H,
        bytes_accessed=Mp * D * x_bytes + w_resident + Mp * Vp * out_bytes,
    )

    use_ktiled = (resident_budget > vmem_soft_cap) and (D % 128 == 0)

    if not use_ktiled:
        vmem_limit = int(max(min(resident_budget, vmem_soft_cap), 16 << 20))
        out = pl.pallas_call(
            _reward_head_kernel,
            out_shape=jax.ShapeDtypeStruct((Mp, Vp), out_dtype),
            grid=(n_row,),
            in_specs=[
                # x tile: pipelined (double-buffered) over rows
                pl.BlockSpec((TM, D), lambda i: (i, 0)),
                # resident operands: constant block index -> single-buffered, DMA'd once
                pl.BlockSpec((D, H), lambda i: (0, 0), pipeline_mode=pl.Buffered(1)),
                pl.BlockSpec((1, H), lambda i: (0, 0), pipeline_mode=pl.Buffered(1)),
                pl.BlockSpec((H, Vp), lambda i: (0, 0), pipeline_mode=pl.Buffered(1)),
                pl.BlockSpec((1, Vp), lambda i: (0, 0), pipeline_mode=pl.Buffered(1)),
            ],
            out_specs=pl.BlockSpec((TM, Vp), lambda i: (i, 0)),
            compiler_params=pltpu.CompilerParams(
                dimension_semantics=("parallel",),
                vmem_limit_bytes=vmem_limit,
            ),
            cost_estimate=cost,
        )(x2d, w1, b1, w2, b2)
    else:
        # Large-D fallback (keeps v7x within 64 MiB without shrinking TM):
        # stream w1 as K tiles, accumulate h in an f32 VMEM scratch, finalize at k==last.
        TK = 128
        for cand in (1024, 512, 256, 128):
            if D % cand == 0:
                TK = cand
                break
        n_k = D // TK
        ktiled_budget = (
            w2.size * 2 + b1.size * 4 + b2.size * 4
            + 2 * (TM * TK * x_bytes + TK * H * 2 + TM * Vp * out_bytes)
            + TM * H * 4 + (4 << 20)
        )
        vmem_limit = int(max(min(ktiled_budget, vmem_soft_cap), 16 << 20))
        out = pl.pallas_call(
            _reward_head_kernel_ktiled,
            out_shape=jax.ShapeDtypeStruct((Mp, Vp), out_dtype),
            grid=(n_row, n_k),
            in_specs=[
                pl.BlockSpec((TM, TK), lambda i, k: (i, k)),   # x K-tiles
                pl.BlockSpec((TK, H), lambda i, k: (k, 0)),    # w1 streamed over K
                pl.BlockSpec((1, H), lambda i, k: (0, 0), pipeline_mode=pl.Buffered(1)),
                pl.BlockSpec((H, Vp), lambda i, k: (0, 0), pipeline_mode=pl.Buffered(1)),
                pl.BlockSpec((1, Vp), lambda i, k: (0, 0), pipeline_mode=pl.Buffered(1)),
            ],
            out_specs=pl.BlockSpec((TM, Vp), lambda i, k: (i, 0)),
            scratch_shapes=[pltpu.VMEM((TM, H), jnp.float32)],
            compiler_params=pltpu.CompilerParams(
                dimension_semantics=("parallel", "arbitrary"),
                vmem_limit_bytes=vmem_limit,
            ),
            cost_estimate=cost,
        )(x2d, w1, b1, w2, b2)

    if return_padded:
        # Padded bins (>= num_values) are exactly 0; padded rows (>= M) are garbage.
        return out
    out = out[:M, :V]
    return out.reshape(*lead, V)


# ----------------------------- reference + demo --------------------------------------------


def _reference_forward(x, params):
    """Plain-JAX reference with the same bf16-matmul / f32-accumulate precision path."""
    xb = x.astype(jnp.bfloat16)
    w1b = params["w1"].astype(jnp.bfloat16)
    h = jnp.dot(xb, w1b, preferred_element_type=jnp.float32) + params["b1"].reshape(-1)
    h = h * jax.nn.sigmoid(h)
    w2b = params["w2"].astype(jnp.bfloat16)
    return (
        jnp.dot(h.astype(jnp.bfloat16), w2b, preferred_element_type=jnp.float32)
        + params["b2"].reshape(-1)
    )


if __name__ == "__main__":
    batch, seq, embed_dim, num_values = 2, 8, 32, 129

    key = jax.random.PRNGKey(0)
    k_params, k_x = jax.random.split(key)
    params = init_reward_head_params(k_params, embed_dim, num_values)
    prep = prepare_reward_head_params(params)  # one-time weight prep (hoisted out of forward)

    x = jax.random.normal(k_x, (batch, seq, embed_dim), dtype=jnp.float32)

    logits = reward_head_forward(x, prep)
    jax.block_until_ready(logits)

    ref = _reference_forward(x.reshape(-1, embed_dim), params).reshape(batch, seq, num_values)
    assert logits.shape == (batch, seq, num_values)
    assert jnp.allclose(logits, ref, atol=2e-3, rtol=2e-3), float(jnp.max(jnp.abs(logits - ref)))

    print("KERNEL_OK")
</pallas_src>

<mosaic_0001>
module attributes {stable_mosaic.version = 11 : i64} {
  func.func @_reward_head_kernel(%arg0: i32, %arg1: memref<16x32xf32, #tpu.memory_space<vmem>>, %arg2: memref<32x64xbf16, #tpu.memory_space<vmem>>, %arg3: memref<1x64xf32, #tpu.memory_space<vmem>>, %arg4: memref<64x256xbf16, #tpu.memory_space<vmem>>, %arg5: memref<1x256xf32, #tpu.memory_space<vmem>>, %arg6: memref<16x256xf32, #tpu.memory_space<vmem>>) attributes {dimension_semantics = [#tpu.dimension_semantics<parallel>], iteration_bounds = array<i64: 1>, scalar_prefetch = 0 : i64, scratch_operands = 0 : i64, tpu.core_type = #tpu.core_type<tc>, window_params = [{transform_indices = @transform_0, window_bounds = array<i64: 16, 32>}, {pipeline_mode = #tpu.pipeline_mode<synchronous>, transform_indices = @transform_1, window_bounds = array<i64: 32, 64>}, {pipeline_mode = #tpu.pipeline_mode<synchronous>, transform_indices = @transform_2, window_bounds = array<i64: 1, 64>}, {pipeline_mode = #tpu.pipeline_mode<synchronous>, transform_indices = @transform_3, window_bounds = array<i64: 64, 256>}, {pipeline_mode = #tpu.pipeline_mode<synchronous>, transform_indices = @transform_4, window_bounds = array<i64: 1, 256>}, {transform_indices = @transform_5, window_bounds = array<i64: 16, 256>}]} {
    %c0 = arith.constant 0 : index
    %c0_0 = arith.constant 0 : index
    %0 = vector.load %arg1[%c0, %c0_0] : memref<16x32xf32, #tpu.memory_space<vmem>>, vector<16x32xf32>
    %1 = arith.truncf %0 : vector<16x32xf32> to vector<16x32xbf16>
    %c0_1 = arith.constant 0 : index
    %c0_2 = arith.constant 0 : index
    %2 = vector.load %arg2[%c0_1, %c0_2] : memref<32x64xbf16, #tpu.memory_space<vmem>>, vector<32x64xbf16>
    %cst = arith.constant dense<0.000000e+00> : vector<16x64xf32>
    %3 = tpu.matmul %1, %2, %cst {dimension_numbers = #tpu.dot_dimension_numbers<[1], [0], [0], [1], [0, 0, 1, 1], [], []>} : vector<16x32xbf16>, vector<32x64xbf16>, vector<16x64xf32> -> vector<16x64xf32>
    %c0_3 = arith.constant 0 : index
    %c0_4 = arith.constant 0 : index
    %4 = vector.load %arg3[%c0_3, %c0_4] : memref<1x64xf32, #tpu.memory_space<vmem>>, vector<1x64xf32>
    %5 = vector.broadcast %4 : vector<1x64xf32> to vector<16x64xf32>
    %6 = arith.addf %3, %5 : vector<16x64xf32>
    %7 = arith.negf %6 : vector<16x64xf32>
    %8 = math.exp %7 : vector<16x64xf32>
    %cst_5 = arith.constant 1.000000e+00 : f32
    %9 = vector.broadcast %cst_5 : f32 to vector<16x64xf32>
    %10 = arith.addf %9, %8 : vector<16x64xf32>
    %11 = arith.divf %9, %10 : vector<16x64xf32>
    %12 = arith.mulf %6, %11 : vector<16x64xf32>
    %13 = arith.truncf %12 : vector<16x64xf32> to vector<16x64xbf16>
    %c0_6 = arith.constant 0 : index
    %c0_7 = arith.constant 0 : index
    %14 = vector.load %arg4[%c0_6, %c0_7] : memref<64x256xbf16, #tpu.memory_space<vmem>>, vector<64x256xbf16>
    %cst_8 = arith.constant dense<0.000000e+00> : vector<16x256xf32>
    %15 = tpu.matmul %13, %14, %cst_8 {dimension_numbers = #tpu.dot_dimension_numbers<[1], [0], [0], [1], [0, 0, 1, 1], [], []>} : vector<16x64xbf16>, vector<64x256xbf16>, vector<16x256xf32> -> vector<16x256xf32>
    %c0_9 = arith.constant 0 : index
    %c0_10 = arith.constant 0 : index
    %16 = vector.load %arg5[%c0_9, %c0_10] : memref<1x256xf32, #tpu.memory_space<vmem>>, vector<1x256xf32>
    %17 = vector.broadcast %16 : vector<1x256xf32> to vector<16x256xf32>
    %18 = arith.addf %15, %17 : vector<16x256xf32>
    %c0_11 = arith.constant 0 : index
    %c0_12 = arith.constant 0 : index
    %19 = vector.load %arg6[%c0_11, %c0_12] : memref<16x256xf32, #tpu.memory_space<vmem>>, vector<16x256xf32>
    tpu.vector_store %arg6[%c0_11, %c0_12], %18 {strides = array<i32>} : memref<16x256xf32, #tpu.memory_space<vmem>>, vector<16x256xf32>,
    return
  }
  func.func @transform_0(%arg0: i32) -> (i32, i32) {
    %c0_i32 = arith.constant 0 : i32
    %c0_i32_0 = arith.constant 0 : i32
    return %arg0, %c0_i32 : i32, i32
  }
  func.func @transform_1(%arg0: i32) -> (i32, i32) {
    %c0_i32 = arith.constant 0 : i32
    %c0_i32_0 = arith.constant 0 : i32
    %c0_i32_1 = arith.constant 0 : i32
    return %c0_i32, %c0_i32_0 : i32, i32
  }
  func.func @transform_2(%arg0: i32) -> (i32, i32) {
    %c0_i32 = arith.constant 0 : i32
    %c0_i32_0 = arith.constant 0 : i32
    %c0_i32_1 = arith.constant 0 : i32
    return %c0_i32, %c0_i32_0 : i32, i32
  }
  func.func @transform_3(%arg0: i32) -> (i32, i32) {
    %c0_i32 = arith.constant 0 : i32
    %c0_i32_0 = arith.constant 0 : i32
    %c0_i32_1 = arith.constant 0 : i32
    return %c0_i32, %c0_i32_0 : i32, i32
  }
  func.func @transform_4(%arg0: i32) -> (i32, i32) {
    %c0_i32 = arith.constant 0 : i32
    %c0_i32_0 = arith.constant 0 : i32
    %c0_i32_1 = arith.constant 0 : i32
    return %c0_i32, %c0_i32_0 : i32, i32
  }
  func.func @transform_5(%arg0: i32) -> (i32, i32) {
    %c0_i32 = arith.constant 0 : i32
    %c0_i32_0 = arith.constant 0 : i32
    return %arg0, %c0_i32 : i32, i32
  }
}

</mosaic_0001>

<llo_original>
// kernel: tpu_custom_call.1
$region0: #{tpu_custom_call.1}
  #allocation0 [shape = 'u32[]', space=smem, size = 0x4, offset = 0x4, fixed_abs, tag = 'smem constant byte address 0x4 - core index']
  #allocation1 [shape = 'u32[144,128]{1,0:T(1,128)}', space=vmem, size = 0x12000, scoped, tag = 'internal scratch']
  %s0 = inlined_call_operand.hbm [shape: f32[16,32], index: 0, kind: input, shape index: {}]
  %s1 = inlined_call_operand.hbm [shape: bf16[32,64], index: 1, kind: input, shape index: {}]
  %s2 = inlined_call_operand.vmem [shape: f32[1,64], index: 2, kind: input, shape index: {}]
  %s3 = inlined_call_operand.hbm [shape: bf16[64,256], index: 3, kind: input, shape index: {}]
  %s4 = inlined_call_operand.vmem [shape: f32[1,256], index: 4, kind: input, shape index: {}]
  %s5 = inlined_call_operand.hbm [shape: f32[16,256], index: 5, kind: output, shape index: {}]
  %s6 = sld [smem:[#allocation0]]
  $region42: #{tpu_custom_call.1} parent=0
    _
  %s8 = ssub.s32 1, %s6
  %s9 = scalar_select 0, %s8, %s6
  $region1: #{tpu_custom_call.1} parent=0
    #allocation2 [shape = 'u8[8192]{0}', space=vmem, size = 0x2000, scoped, tag = 'input window, operand 0, single buffered']
    #allocation3 [shape = 's32[1]{0}', space=sflag, size = 0x4, scoped, tag = 'scoped memory for tpu_custom_call.1']
    #allocation4 [shape = 's32[1]{0}', space=sflag, size = 0x4, scoped, tag = 'scoped memory for tpu_custom_call.1']
    #allocation5 [shape = 'u8[8192]{0}', space=vmem, size = 0x2000, scoped, tag = 'input window, operand 1, single buffered']
    #allocation6 [shape = 's32[1]{0}', space=sflag, size = 0x4, scoped, tag = 'scoped memory for tpu_custom_call.1']
    #allocation7 [shape = 'u8[32768]{0}', space=vmem, size = 0x8000, scoped, tag = 'input window, operand 3, single buffered']
    #allocation8 [shape = 'u8[16384]{0}', space=vmem, size = 0x4000, scoped, tag = 'output window, operand 0, single buffered']
    %10 = vsyncpa [#allocation3], 0
    %11 = vsyncpa [#allocation6], 0
    %12 = vsyncpa [#allocation4], 0
    // Predicated region
    $region2: #{tpu_custom_call.1} parent=1 // pred_check
      _
    $region3: #{tpu_custom_call.1} parent=1 // pred_check_branch
      %14 = sbr.rel (0) target = $region5
    $region4: #{tpu_custom_call.1} parent=1 // pred_region
      %s16 = ssub.s32 256, 256
      %17 = vsyncadd [#allocation3], %s16
      %s18 = sshll.u32 [#allocation2], 4
      %s19 = int_to_ptr.vmem [resolvable:$true] %s18
      %24 = dma.hbm_to_vmem [thread:$0]  %s0, 256, %s19, [#allocation3], 128, 128, 8
    $region5: #{tpu_custom_call.1} parent=1 // pred_fallthru
      _
    // Predicated region
    $region6: #{tpu_custom_call.1} parent=1 // pred_check
      _
    $region7: #{tpu_custom_call.1} parent=1 // pred_check_branch
      %26 = sbr.rel (0) target = $region9
    $region8: #{tpu_custom_call.1} parent=1 // pred_region
      %s28 = ssub.s32 256, 256
      %29 = vsyncadd [#allocation6], %s28
      %s30 = sshll.u32 [#allocation5], 4
      %s31 = int_to_ptr.vmem [resolvable:$true] %s30
      %36 = dma.hbm_to_vmem [thread:$0]  %s1, 256, %s31, [#allocation6], 64, 64, 4
    $region9: #{tpu_custom_call.1} parent=1 // pred_fallthru
      _
    // Predicated region
    $region10: #{tpu_custom_call.1} parent=1 // pred_check
      _
    $region11: #{tpu_custom_call.1} parent=1 // pred_check_branch
      %38 = sbr.rel (0) target = $region13
    $region12: #{tpu_custom_call.1} parent=1 // pred_region
      _
    $region13: #{tpu_custom_call.1} parent=1 // pred_fallthru
      _
    // Predicated region
    $region14: #{tpu_custom_call.1} parent=1 // pred_check
      _
    $region15: #{tpu_custom_call.1} parent=1 // pred_check_branch
      %40 = sbr.rel (0) target = $region17
    $region16: #{tpu_custom_call.1} parent=1 // pred_region
      %s42 = ssub.s32 1024, 1024
      %43 = vsyncadd [#allocation6], %s42
      %s44 = sshll.u32 [#allocation7], 4
      %s45 = int_to_ptr.vmem [resolvable:$true] %s44
      %50 = dma.hbm_to_vmem [thread:$0]  %s3, 1024, %s45, [#allocation6], 128, 128, 8
    $region17: #{tpu_custom_call.1} parent=1 // pred_fallthru
      _
    // Predicated region
    $region18: #{tpu_custom_call.1} parent=1 // pred_check
      _
    $region19: #{tpu_custom_call.1} parent=1 // pred_check_branch
      %52 = sbr.rel (0) target = $region21
    $region20: #{tpu_custom_call.1} parent=1 // pred_region
      _
    $region21: #{tpu_custom_call.1} parent=1 // pred_fallthru
      _
    // Predicated region
    $region22: #{tpu_custom_call.1} parent=1 // pred_check
      _
    $region23: #{tpu_custom_call.1} parent=1 // pred_check_branch
      %54 = sbr.rel (0) target = $region25
    $region24: #{tpu_custom_call.1} parent=1 // pred_region
      %55 = dma.done [#allocation3], 256
    $region25: #{tpu_custom_call.1} parent=1 // pred_fallthru
      _
    // Predicated region
    $region26: #{tpu_custom_call.1} parent=1 // pred_check
      _
    $region27: #{tpu_custom_call.1} parent=1 // pred_check_branch
      %57 = sbr.rel (0) target = $region29
    $region28: #{tpu_custom_call.1} parent=1 // pred_region
      %58 = dma.done [#allocation6], 256
    $region29: #{tpu_custom_call.1} parent=1 // pred_fallthru
      _
    // Predicated region
    $region30: #{tpu_custom_call.1} parent=1 // pred_check
      _
    $region31: #{tpu_custom_call.1} parent=1 // pred_check_branch
      %60 = sbr.rel (0) target = $region33
    $region32: #{tpu_custom_call.1} parent=1 // pred_region
      %61 = dma.done [#allocation6], 1024
    $region33: #{tpu_custom_call.1} parent=1 // pred_fallthru
      _
    %v63 = vld [vmem:[#allocation2] sm:$0xff]
    %v64 = vld [vmem:[#allocation2 + $0x8] sm:$0xff]
    %v65 = vpack.c.bf16 %v64, %v63
    %v66 = vld [vmem:[#allocation5] sm:$0xf]
    %v67 = vld [vmem:[#allocation5 + $0x4] sm:$0xf]
    %v68 = vld [vmem:[#allocation5 + $0x8] sm:$0xf]
    %v69 = vld [vmem:[#allocation5 + $0xc] sm:$0xf]
    %v70 = vld [vmem:[%s2] sm:$0x1]
    %v72 = vlaneseq
    %v73 = vshrl.u32 %v72, 7
    %v74 = vsub.s32 0, %v73
    %v75 = vrot.slane %v70, %v74
    %v81 = vunpack.c.l.b16 %v66
    %v82 = vunpack.c.l.b16 %v67
    %v83 = vunpack.c.l.b16 %v68
    %v84 = vunpack.c.l.b16 %v69
    %v85 = vpack.c.b16 %v82, %v81
    %v86 = vpack.c.b16 %v84, %v83
    %vm89 = vcmask 261120
    %v91 = vsel %vm89, %v65, 0
    %93 = vmatprep.subr.bf16.mxu0 0
    %94 = vmatpush1.bf16.msra.mxu0 0
    %95 = vmatprep.subr.bf16.mxu0 0
    %96 = vmatpush1.bf16.msra.mxu0 0
    %97 = vmatprep.subr.bf16.mxu0 0
    %98 = vmatpush1.bf16.msra.mxu0 0
    %99 = vmatprep.subr.bf16.mxu0 0
    %100 = vmatpush1.bf16.msra.mxu0 0
    %101 = vmatprep.subr.bf16.mxu0 0
    %102 = vmatpush1.bf16.msra.mxu0 0
    %103 = vmatprep.subr.bf16.mxu0 0
    %104 = vmatpush1.bf16.msra.mxu0 0
    %105 = vmatprep.subr.bf16.mxu0 0
    %106 = vmatpush1.bf16.msra.mxu0 %v86
    %107 = vmatprep.subr.bf16.mxu0 0
    %108 = vmatpush1.bf16.msra.mxu0 %v85
    %109 = vmatprep.subr.bf16.mxu0 0
    %110 = vmatpush2.bf16.msra.mxu0 0
    %111 = vmatprep.subr.bf16.mxu0 0
    %112 = vmatpush2.bf16.msra.mxu0 0
    %113 = vmatprep.subr.bf16.mxu0 0
    %114 = vmatpush2.bf16.msra.mxu0 0
    %115 = vmatprep.subr.bf16.mxu0 0
    %116 = vmatpush2.bf16.msra.mxu0 0
    %117 = vmatprep.subr.bf16.mxu0 0
    %118 = vmatpush2.bf16.msra.mxu0 0
    %119 = vmatprep.subr.bf16.mxu0 0
    %120 = vmatpush2.bf16.msra.mxu0 0
    %121 = vmatprep.subr.bf16.mxu0 0
    %122 = vmatpush2.bf16.msra.mxu0 0
    %123 = vmatprep.subr.bf16.mxu0 0
    %124 = vmatpush2.bf16.msra.mxu0 0
    %125 = vmatprep.mubr.bf16.mxu0 0
    %126 = vmatmul.mubr.bf16.gmra.mxu0 %v91
    %v127 = vpop.f32.mrf.mxu0
    %v128 = vadd.f32 %v75, %v127
    %v129 = vpop.f32.mrf.mxu0
    %v130 = vpop.f32.mrf.mxu0
    %v131 = vadd.f32 %v75, %v130
    %v132 = vpop.f32.mrf.mxu0
    %133 = vdwg.mxu0
    %v134 = vxor.u32 %v128, 2147483648
    %v135 = vxor.u32 %v131, 2147483648
    %v136 = vmul.f32 %v134, 1.442695
    %v137 = vpow.pop %v136
    %v138 = vmul.f32 %v135, 1.442695
    %v139 = vpow.pop %v138
    %v140 = vadd.f32 %v137, 1.0
    %v141 = vadd.f32 %v139, 1.0
    %v142 = vrcp.pop %v140
    %v143 = vmul.f32 1.0, %v142
    %v144 = vrcp.pop %v141
    %v145 = vmul.f32 1.0, %v144
    %v146 = vmul.f32 %v128, %v143
    %v147 = vmul.f32 %v131, %v145
    %v148 = vpack.c.bf16 %v147, %v146
    %v149 = vld [vmem:[#allocation7] sm:$0xff]
    %v150 = vld [vmem:[#allocation7 + $0x8] sm:$0xff]
    %v151 = vld [vmem:[#allocation7 + $0x10] sm:$0xff]
    %v152 = vld [vmem:[#allocation7 + $0x18] sm:$0xff]
    %v153 = vld [vmem:[#allocation7 + $0x20] sm:$0xff]
    %v154 = vld [vmem:[#allocation7 + $0x28] sm:$0xff]
    %v155 = vld [vmem:[#allocation7 + $0x30] sm:$0xff]
    %v156 = vld [vmem:[#allocation7 + $0x38] sm:$0xff]
    %v157 = vld [vmem:[%s4] sm:$0x3]
    %v159 = vlaneseq
    %v160 = vshrl.u32 %v159, 7
    %v161 = vsub.s32 0, %v160
    %v162 = vrot.slane %v157, %v161
    %v163 = vlaneseq
    %v164 = vshrl.u32 %v163, 7
    %v165 = vsub.s32 1, %v164
    %v166 = vrot.slane %v157, %v165
    %v177 = vunpack.c.l.b16 %v149
    %v178 = vunpack.c.h.b16 %v149
    %v179 = vunpack.c.l.b16 %v150
    %v180 = vunpack.c.h.b16 %v150
    %v181 = vunpack.c.l.b16 %v151
    %v182 = vunpack.c.h.b16 %v151
    %v183 = vunpack.c.l.b16 %v152
    %v184 = vunpack.c.h.b16 %v152
    %v185 = vunpack.c.l.b16 %v153
    %v186 = vunpack.c.h.b16 %v153
    %v187 = vunpack.c.l.b16 %v154
    %v188 = vunpack.c.h.b16 %v154
    %v189 = vunpack.c.l.b16 %v155
    %v190 = vunpack.c.h.b16 %v155
    %v191 = vunpack.c.l.b16 %v156
    %v192 = vunpack.c.h.b16 %v156
    %v193 = vpack.c.b16 %v179, %v177
    %v194 = vpack.c.b16 %v180, %v178
    %v195 = vpack.c.b16 %v183, %v181
    %v196 = vpack.c.b16 %v184, %v182
    %v197 = vpack.c.b16 %v187, %v185
    %v198 = vpack.c.b16 %v188, %v186
    %v199 = vpack.c.b16 %v191, %v189
    %v200 = vpack.c.b16 %v192, %v190
    %vm209 = vcmask 523264
    %v211 = vsel %vm209, %v148, 0
    %213 = vmatprep.subr.bf16.mxu0 0
    %214 = vmatpush1.bf16.msra.mxu0 0
    %215 = vmatprep.subr.bf16.mxu0 0
    %216 = vmatpush1.bf16.msra.mxu0 0
    %217 = vmatprep.subr.bf16.mxu0 0
    %218 = vmatpush1.bf16.msra.mxu0 0
    %219 = vmatprep.subr.bf16.mxu0 0
    %220 = vmatpush1.bf16.msra.mxu0 0
    %221 = vmatprep.subr.bf16.mxu0 %v200
    %222 = vmatpush1.bf16.msra.mxu0 %v199
    %223 = vmatprep.subr.bf16.mxu0 %v198
    %224 = vmatpush1.bf16.msra.mxu0 %v197
    %225 = vmatprep.subr.bf16.mxu0 %v196
    %226 = vmatpush1.bf16.msra.mxu0 %v195
    %227 = vmatprep.subr.bf16.mxu0 %v194
    %228 = vmatpush1.bf16.msra.mxu0 %v193
    %229 = vmatprep.subr.bf16.mxu0 0
    %230 = vmatpush2.bf16.msra.mxu0 0
    %231 = vmatprep.subr.bf16.mxu0 0
    %232 = vmatpush2.bf16.msra.mxu0 0
    %233 = vmatprep.subr.bf16.mxu0 0
    %234 = vmatpush2.bf16.msra.mxu0 0
    %235 = vmatprep.subr.bf16.mxu0 0
    %236 = vmatpush2.bf16.msra.mxu0 0
    %237 = vmatprep.subr.bf16.mxu0 0
    %238 = vmatpush2.bf16.msra.mxu0 0
    %239 = vmatprep.subr.bf16.mxu0 0
    %240 = vmatpush2.bf16.msra.mxu0 0
    %241 = vmatprep.subr.bf16.mxu0 0
    %242 = vmatpush2.bf16.msra.mxu0 0
    %243 = vmatprep.subr.bf16.mxu0 0
    %244 = vmatpush2.bf16.msra.mxu0 0
    %245 = vmatprep.mubr.bf16.mxu0 0
    %246 = vmatmul.mubr.bf16.gmra.mxu0 %v211
    %v247 = vpop.f32.mrf.mxu0
    %v248 = vadd.f32 %v162, %v247
    %v249 = vpop.f32.mrf.mxu0
    %v250 = vadd.f32 %v166, %v249
    %v251 = vpop.f32.mrf.mxu0
    %v252 = vadd.f32 %v162, %v251
    %v253 = vpop.f32.mrf.mxu0
    %v254 = vadd.f32 %v166, %v253
    %255 = vdwg.mxu0
    %256 = vst [vmem:[#allocation8] sm:$0xff] %v248
    %257 = vst [vmem:[#allocation8 + $0x8] sm:$0xff] %v250
    %258 = vst [vmem:[#allocation8 + $0x10] sm:$0xff] %v252
    %259 = vst [vmem:[#allocation8 + $0x18] sm:$0xff] %v254
    // Predicated region
    $region34: #{tpu_custom_call.1} parent=1 // pred_check
      _
    $region35: #{tpu_custom_call.1} parent=1 // pred_check_branch
      %261 = sbr.rel (0) target = $region37
    $region36: #{tpu_custom_call.1} parent=1 // pred_region
      %s263 = ssub.s32 512, 512
      %264 = vsyncadd [#allocation4], %s263
      %s265 = sshll.u32 [#allocation8], 4
      %s266 = int_to_ptr.vmem [resolvable:$true] %s265
      %271 = dma.vmem_to_hbm [thread:$0]  %s266, 512, %s5, [#allocation4], 256, 256, 16
    $region37: #{tpu_custom_call.1} parent=1 // pred_fallthru
      _
    // Predicated region
    $region38: #{tpu_custom_call.1} parent=1 // pred_check
      _
    $region39: #{tpu_custom_call.1} parent=1 // pred_check_branch
      %273 = sbr.rel (0) target = $region41
    $region40: #{tpu_custom_call.1} parent=1 // pred_region
      %274 = dma.done [#allocation4], 512
    $region41: #{tpu_custom_call.1} parent=1 // pred_fallthru
      _
    %275 = vsyncpa [#allocation3], 1
    %276 = vsyncpa [#allocation6], 1
    %277 = vsyncpa [#allocation4], 1

</llo_original>
